<compile_context>
chip_gen: v7x
topology: tpu7x:2x2x1
jax: 0.10.0
libtpu: 0.0.40
codegen_flags: <defaults>
</compile_context>

<pallas_src>
import jax
import jax.numpy as jnp
from jax.experimental import pallas as pl
from jax.experimental.pallas import tpu as pltpu


def _round_up(n, m):
    return ((n + m - 1) // m) * m


def make_predictor_kernel(d_in, hidden, latent, uc_dim, d_out, row_block):
    """Builds the kernel with static (Python-int) slice offsets baked in."""
    o_we1 = 0 * row_block   # (d_in,   hidden)
    o_wf1 = 1 * row_block   # (hidden, latent)   = We2 @ K
    o_bc  = 2 * row_block   # (uc_dim, latent)   = [B1; B2]
    o_wd1 = 3 * row_block   # (latent, hidden)
    o_wf2 = 4 * row_block   # (hidden, d_out)    = Wd2 @ Wl

    def kernel(x_ref, uc_ref, w_ref, b_ref, out_ref):
        x = x_ref[...]
        uc = uc_ref[...]

        # Static slices of the packed weight / bias buffers (zero runtime cost).
        we1 = w_ref[o_we1:o_we1 + d_in,   0:hidden]
        wf1 = w_ref[o_wf1:o_wf1 + hidden, 0:latent]
        bc  = w_ref[o_bc:o_bc + uc_dim,   0:latent]
        wd1 = w_ref[o_wd1:o_wd1 + latent, 0:hidden]
        wf2 = w_ref[o_wf2:o_wf2 + hidden, 0:d_out]

        be1 = b_ref[0:1, 0:hidden]
        bf1 = b_ref[1:2, 0:latent]   # be2@K + badd (folded)
        bd1 = b_ref[2:3, 0:hidden]
        bf2 = b_ref[3:4, 0:d_out]    # bd2@Wl + bl  (folded)

        # encoder layer 1 (only nonlinearity boundary that cannot be folded)
        h = jnp.maximum(
            jnp.dot(x, we1, preferred_element_type=jnp.float32) + be1, 0.0)
        # encoder layer 2 + Koopman step + control inputs, all folded: 2 dots
        zp = (jnp.dot(h, wf1, preferred_element_type=jnp.float32)
              + jnp.dot(uc, bc, preferred_element_type=jnp.float32)
              + bf1)
        # decoder layer 1
        hd = jnp.maximum(
            jnp.dot(zp, wd1, preferred_element_type=jnp.float32) + bd1, 0.0)
        # decoder layer 2 + final linear, folded: 1 dot
        out_ref[...] = jnp.dot(hd, wf2, preferred_element_type=jnp.float32) + bf2

    return kernel


def pack_params(p):
    """Folds matmul chains and packs everything into two VMEM operands."""
    d_in, hidden = p["we1"].shape
    latent = p["we2"].shape[1]
    u_dim = p["b1"].shape[0]
    d_out = p["wl"].shape[1]
    uc_dim = 2 * u_dim

    # --- algebraic folding (done once, outside the kernel) ---
    wf1 = p["we2"] @ p["k"]                    # (hidden, latent)
    bf1 = p["be2"] @ p["k"] + p["badd"]        # (1, latent)
    bc = jnp.concatenate([p["b1"], p["b2"]], axis=0)   # (2*u_dim, latent)
    wf2 = p["wd2"] @ p["wl"]                   # (hidden, d_out)
    bf2 = p["bd2"] @ p["wl"] + p["bl"]         # (1, d_out)

    row_block = _round_up(max(d_in, hidden, latent, uc_dim), 8)
    col_width = max(hidden, latent, d_out)

    def pad_block(w):
        r, c = w.shape
        return jnp.pad(w, ((0, row_block - r), (0, col_width - c)))

    def pad_bias(b):
        return jnp.pad(b, ((0, 0), (0, col_width - b.shape[1])))

    w_packed = jnp.concatenate(
        [pad_block(w) for w in (p["we1"], wf1, bc, p["wd1"], wf2)], axis=0)
    b_packed = jnp.concatenate(
        [pad_bias(b) for b in (p["be1"], bf1, p["bd1"], bf2)], axis=0)

    dims = dict(d_in=d_in, hidden=hidden, latent=latent, uc_dim=uc_dim,
                d_out=d_out, row_block=row_block)
    return w_packed, b_packed, dims


def predictor_forward(x, u1, u2, w_packed, b_packed, dims):
    """Full Predictor forward pass in a single Pallas call (4 input DMAs)."""
    B = x.shape[0]
    d_out = dims["d_out"]
    uc = jnp.concatenate([u1, u2], axis=1)     # fuse the two control inputs

    kernel = make_predictor_kernel(dims["d_in"], dims["hidden"], dims["latent"],
                                   dims["uc_dim"], d_out, dims["row_block"])

    flops = 2 * B * (dims["d_in"] * dims["hidden"]
                     + dims["hidden"] * dims["latent"]
                     + dims["uc_dim"] * dims["latent"]
                     + dims["latent"] * dims["hidden"]
                     + dims["hidden"] * d_out)
    bytes_accessed = 4 * (x.size + uc.size + w_packed.size + b_packed.size
                          + B * d_out)

    vmem = pl.BlockSpec(memory_space=pltpu.MemorySpace.VMEM)
    return pl.pallas_call(
        kernel,
        out_shape=jax.ShapeDtypeStruct((B, d_out), jnp.float32),
        in_specs=[vmem, vmem, vmem, vmem],
        out_specs=vmem,
        cost_estimate=pl.CostEstimate(flops=flops, transcendentals=0,
                                      bytes_accessed=int(bytes_accessed)),
    )(x, uc, w_packed, b_packed)


def init_params(key, d_in, hidden, latent, u_dim, d_out):
    """Deterministic synthetic parameter init (all weights as [in, out])."""
    ks = jax.random.split(key, 16)
    scale = 0.1

    def w(k, shape):
        return scale * jax.random.normal(k, shape, dtype=jnp.float32)

    return {
        # encoder: d_in -> hidden -> latent
        "we1": w(ks[0], (d_in, hidden)),   "be1": w(ks[1], (1, hidden)),
        "we2": w(ks[2], (hidden, latent)), "be2": w(ks[3], (1, latent)),
        # adder: z' = zK + u1 B1 + u2 B2 + b
        "k":   w(ks[4], (latent, latent)),
        "b1":  w(ks[5], (u_dim, latent)),
        "b2":  w(ks[6], (u_dim, latent)),
        "badd": w(ks[7], (1, latent)),
        # decoder: latent -> hidden -> d_in
        "wd1": w(ks[8], (latent, hidden)),  "bd1": w(ks[9], (1, hidden)),
        "wd2": w(ks[10], (hidden, d_in)),   "bd2": w(ks[11], (1, d_in)),
        # final linear: d_in (== linear_input_dim) -> d_out (== linear_output_dim)
        "wl":  w(ks[12], (d_in, d_out)),    "bl": w(ks[13], (1, d_out)),
    }


def reference_forward(x, u1, u2, p):
    """Unfolded pure-JAX reference of the original module's forward pass."""
    h = jnp.maximum(x @ p["we1"] + p["be1"], 0.0)
    z = h @ p["we2"] + p["be2"]
    zp = z @ p["k"] + u1 @ p["b1"] + u2 @ p["b2"] + p["badd"]
    hd = jnp.maximum(zp @ p["wd1"] + p["bd1"], 0.0)
    y = hd @ p["wd2"] + p["bd2"]
    return y @ p["wl"] + p["bl"]


if __name__ == "__main__":
    # small shapes consistent with the module's forward()
    batch = 8
    linear_input_dim = 32   # state-vector dim == final linear in_features
    hidden = 32
    latent = 16
    u_dim = 8
    linear_output_dim = 32

    key = jax.random.PRNGKey(0)
    k_x, k_u1, k_u2, k_p = jax.random.split(key, 4)

    x = jax.random.normal(k_x, (batch, linear_input_dim), dtype=jnp.float32)
    u1 = jax.random.normal(k_u1, (batch, u_dim), dtype=jnp.float32)
    u2 = jax.random.normal(k_u2, (batch, u_dim), dtype=jnp.float32)

    # mirrors: assert x[0].shape[1] == self.linear_input_dim
    assert x.shape[1] == linear_input_dim

    params = init_params(k_p, linear_input_dim, hidden, latent, u_dim,
                         linear_output_dim)

    # one-time fold + pack (outside the kernel / outside the hot path)
    w_packed, b_packed, dims = pack_params(params)
    w_packed = jax.block_until_ready(w_packed)
    b_packed = jax.block_until_ready(b_packed)

    out = predictor_forward(x, u1, u2, w_packed, b_packed, dims)
    out = jax.block_until_ready(out)

    ref = reference_forward(x, u1, u2, params)
    assert out.shape == (batch, linear_output_dim)
    assert jnp.allclose(out, ref, atol=1e-4, rtol=1e-4)

    print("KERNEL_OK")
</pallas_src>

<mosaic_0001>
module attributes {stable_mosaic.version = 11 : i64} {
  func.func @kernel(%arg0: memref<8x32xf32, #tpu.memory_space<vmem>>, %arg1: memref<8x16xf32, #tpu.memory_space<vmem>>, %arg2: memref<160x32xf32, #tpu.memory_space<vmem>>, %arg3: memref<4x32xf32, #tpu.memory_space<vmem>>, %arg4: memref<8x32xf32, #tpu.memory_space<vmem>>) attributes {dimension_semantics = [], scalar_prefetch = 0 : i64, scratch_operands = 0 : i64, tpu.core_type = #tpu.core_type<tc>} {
    %c0 = arith.constant 0 : index
    %c0_0 = arith.constant 0 : index
    %0 = vector.load %arg0[%c0, %c0_0] : memref<8x32xf32, #tpu.memory_space<vmem>>, vector<8x32xf32>
    %c0_1 = arith.constant 0 : index
    %c0_2 = arith.constant 0 : index
    %1 = vector.load %arg1[%c0_1, %c0_2] : memref<8x16xf32, #tpu.memory_space<vmem>>, vector<8x16xf32>
    %c0_3 = arith.constant 0 : index
    %c0_4 = arith.constant 0 : index
    %2 = vector.load %arg2[%c0_3, %c0_4] : memref<160x32xf32, #tpu.memory_space<vmem>>, vector<32x32xf32>
    %c32 = arith.constant 32 : index
    %c0_5 = arith.constant 0 : index
    %3 = vector.load %arg2[%c32, %c0_5] : memref<160x32xf32, #tpu.memory_space<vmem>>, vector<32x16xf32>
    %c64 = arith.constant 64 : index
    %c0_6 = arith.constant 0 : index
    %4 = vector.load %arg2[%c64, %c0_6] : memref<160x32xf32, #tpu.memory_space<vmem>>, vector<16x16xf32>
    %c96 = arith.constant 96 : index
    %c0_7 = arith.constant 0 : index
    %5 = vector.load %arg2[%c96, %c0_7] : memref<160x32xf32, #tpu.memory_space<vmem>>, vector<16x32xf32>
    %c128 = arith.constant 128 : index
    %c0_8 = arith.constant 0 : index
    %6 = vector.load %arg2[%c128, %c0_8] : memref<160x32xf32, #tpu.memory_space<vmem>>, vector<32x32xf32>
    %c0_9 = arith.constant 0 : index
    %c0_10 = arith.constant 0 : index
    %7 = vector.load %arg3[%c0_9, %c0_10] : memref<4x32xf32, #tpu.memory_space<vmem>>, vector<1x32xf32>
    %c1 = arith.constant 1 : index
    %c0_11 = arith.constant 0 : index
    %8 = vector.load %arg3[%c1, %c0_11] : memref<4x32xf32, #tpu.memory_space<vmem>>, vector<1x16xf32>
    %c2 = arith.constant 2 : index
    %c0_12 = arith.constant 0 : index
    %9 = vector.load %arg3[%c2, %c0_12] : memref<4x32xf32, #tpu.memory_space<vmem>>, vector<1x32xf32>
    %c3 = arith.constant 3 : index
    %c0_13 = arith.constant 0 : index
    %10 = vector.load %arg3[%c3, %c0_13] : memref<4x32xf32, #tpu.memory_space<vmem>>, vector<1x32xf32>
    %cst = arith.constant dense<0.000000e+00> : vector<8x32xf32>
    %11 = tpu.matmul %0, %2, %cst {dimension_numbers = #tpu.dot_dimension_numbers<[1], [0], [0], [1], [0, 0, 1, 1], [], []>} : vector<8x32xf32>, vector<32x32xf32>, vector<8x32xf32> -> vector<8x32xf32>
    %12 = vector.broadcast %7 : vector<1x32xf32> to vector<8x32xf32>
    %13 = arith.addf %11, %12 : vector<8x32xf32>
    %cst_14 = arith.constant 0.000000e+00 : f32
    %14 = vector.broadcast %cst_14 : f32 to vector<8x32xf32>
    %15 = arith.maximumf %13, %14 : vector<8x32xf32>
    %cst_15 = arith.constant dense<0.000000e+00> : vector<8x16xf32>
    %16 = tpu.matmul %15, %3, %cst_15 {dimension_numbers = #tpu.dot_dimension_numbers<[1], [0], [0], [1], [0, 0, 1, 1], [], []>} : vector<8x32xf32>, vector<32x16xf32>, vector<8x16xf32> -> vector<8x16xf32>
    %cst_16 = arith.constant dense<0.000000e+00> : vector<8x16xf32>
    %17 = tpu.matmul %1, %4, %cst_16 {dimension_numbers = #tpu.dot_dimension_numbers<[1], [0], [0], [1], [0, 0, 1, 1], [], []>} : vector<8x16xf32>, vector<16x16xf32>, vector<8x16xf32> -> vector<8x16xf32>
    %18 = arith.addf %16, %17 : vector<8x16xf32>
    %19 = vector.broadcast %8 : vector<1x16xf32> to vector<8x16xf32>
    %20 = arith.addf %18, %19 : vector<8x16xf32>
    %cst_17 = arith.constant dense<0.000000e+00> : vector<8x32xf32>
    %21 = tpu.matmul %20, %5, %cst_17 {dimension_numbers = #tpu.dot_dimension_numbers<[1], [0], [0], [1], [0, 0, 1, 1], [], []>} : vector<8x16xf32>, vector<16x32xf32>, vector<8x32xf32> -> vector<8x32xf32>
    %22 = vector.broadcast %9 : vector<1x32xf32> to vector<8x32xf32>
    %23 = arith.addf %21, %22 : vector<8x32xf32>
    %cst_18 = arith.constant 0.000000e+00 : f32
    %24 = vector.broadcast %cst_18 : f32 to vector<8x32xf32>
    %25 = arith.maximumf %23, %24 : vector<8x32xf32>
    %cst_19 = arith.constant dense<0.000000e+00> : vector<8x32xf32>
    %26 = tpu.matmul %25, %6, %cst_19 {dimension_numbers = #tpu.dot_dimension_numbers<[1], [0], [0], [1], [0, 0, 1, 1], [], []>} : vector<8x32xf32>, vector<32x32xf32>, vector<8x32xf32> -> vector<8x32xf32>
    %27 = vector.broadcast %10 : vector<1x32xf32> to vector<8x32xf32>
    %28 = arith.addf %26, %27 : vector<8x32xf32>
    %c0_20 = arith.constant 0 : index
    %c0_21 = arith.constant 0 : index
    %29 = vector.load %arg4[%c0_20, %c0_21] : memref<8x32xf32, #tpu.memory_space<vmem>>, vector<8x32xf32>
    tpu.vector_store %arg4[%c0_20, %c0_21], %28 {strides = array<i32>} : memref<8x32xf32, #tpu.memory_space<vmem>>, vector<8x32xf32>,
    return
  }
}

</mosaic_0001>

<llo_original>
// kernel: tpu_custom_call.1
$region0: #{tpu_custom_call.1}
  #allocation0 [shape = 'u32[]', space=smem, size = 0x4, offset = 0x4, fixed_abs, tag = 'smem constant byte address 0x4 - core index']
  #allocation1 [shape = 'u32[144,128]{1,0:T(1,128)}', space=vmem, size = 0x12000, scoped, tag = 'internal scratch']
  %s0 = inlined_call_operand.vmem [shape: f32[8,32], index: 0, kind: input, shape index: {}]
  %s1 = inlined_call_operand.vmem [shape: f32[8,16], index: 1, kind: input, shape index: {}]
  %s2 = inlined_call_operand.vmem [shape: f32[160,32], index: 2, kind: input, shape index: {}]
  %s3 = inlined_call_operand.vmem [shape: f32[4,32], index: 3, kind: input, shape index: {}]
  %s4 = inlined_call_operand.hbm [shape: f32[8,32], index: 4, kind: output, shape index: {}]
  %s5 = sld [smem:[#allocation0]]
  $region26: #{tpu_custom_call.1} parent=0
    _
  %s7 = ssub.s32 1, %s5
  %s8 = scalar_select 0, %s7, %s5
  $region1: #{tpu_custom_call.1} parent=0
    #allocation2 [shape = 'u8[4096]{0}', space=vmem, size = 0x1000, scoped, tag = 'output window, operand 0, single buffered']
    #allocation3 [shape = 's32[1]{0}', space=sflag, size = 0x4, scoped, tag = 'scoped memory for tpu_custom_call.1']
    %9 = vsyncpa [#allocation3], 0
    // Predicated region
    $region2: #{tpu_custom_call.1} parent=1 // pred_check
      _
    $region3: #{tpu_custom_call.1} parent=1 // pred_check_branch
      %11 = sbr.rel (0) target = $region5
    $region4: #{tpu_custom_call.1} parent=1 // pred_region
      _
    $region5: #{tpu_custom_call.1} parent=1 // pred_fallthru
      _
    // Predicated region
    $region6: #{tpu_custom_call.1} parent=1 // pred_check
      _
    $region7: #{tpu_custom_call.1} parent=1 // pred_check_branch
      %13 = sbr.rel (0) target = $region9
    $region8: #{tpu_custom_call.1} parent=1 // pred_region
      _
    $region9: #{tpu_custom_call.1} parent=1 // pred_fallthru
      _
    // Predicated region
    $region10: #{tpu_custom_call.1} parent=1 // pred_check
      _
    $region11: #{tpu_custom_call.1} parent=1 // pred_check_branch
      %15 = sbr.rel (0) target = $region13
    $region12: #{tpu_custom_call.1} parent=1 // pred_region
      _
    $region13: #{tpu_custom_call.1} parent=1 // pred_fallthru
      _
    // Predicated region
    $region14: #{tpu_custom_call.1} parent=1 // pred_check
      _
    $region15: #{tpu_custom_call.1} parent=1 // pred_check_branch
      %17 = sbr.rel (0) target = $region17
    $region16: #{tpu_custom_call.1} parent=1 // pred_region
      _
    $region17: #{tpu_custom_call.1} parent=1 // pred_fallthru
      _
    %v18 = vld [vmem:[%s0] sm:$0xff]
    %v19 = vld [vmem:[%s1] sm:$0xff]
    %v20 = vld [vmem:[%s2] sm:$0xff]
    %v21 = vld [vmem:[%s2 + $0x8] sm:$0xff]
    %v22 = vld [vmem:[%s2 + $0x10] sm:$0xff]
    %v23 = vld [vmem:[%s2 + $0x18] sm:$0xff]
    %v24 = vld [vmem:[%s2 + $0x20] sm:$0xff]
    %v25 = vld [vmem:[%s2 + $0x28] sm:$0xff]
    %v26 = vld [vmem:[%s2 + $0x30] sm:$0xff]
    %v27 = vld [vmem:[%s2 + $0x38] sm:$0xff]
    %v28 = vld [vmem:[%s2 + $0x40] sm:$0xff]
    %v29 = vld [vmem:[%s2 + $0x48] sm:$0xff]
    %v30 = vld [vmem:[%s2 + $0x60] sm:$0xff]
    %v31 = vld [vmem:[%s2 + $0x68] sm:$0xff]
    %v32 = vld [vmem:[%s2 + $0x80] sm:$0xff]
    %v33 = vld [vmem:[%s2 + $0x88] sm:$0xff]
    %v34 = vld [vmem:[%s2 + $0x90] sm:$0xff]
    %v35 = vld [vmem:[%s2 + $0x98] sm:$0xff]
    %v36 = vld [vmem:[%s3] sm:$0x1]
    %v37 = vld [vmem:[%s3 + $0x1] sm:$0x1]
    %v38 = vld [vmem:[%s3 + $0x2] sm:$0x1]
    %v39 = vld [vmem:[%s3 + $0x3] sm:$0x1]
    %v40 = vlaneseq
    %v41 = vshrl.u32 %v40, 7
    %v42 = vsub.s32 0, %v41
    %v43 = vrot.slane %v36, %v42
    %vm44 = vcmask 261120
    %v46 = vsel %vm44, %v18, 0
    %48 = vmatprep.subr.mxu0 0.0
    %49 = vmatpush1.msra.mxu0 %v20
    %50 = vmatprep.subr.mxu0 0.0
    %51 = vmatpush1.msra.mxu0 %v21
    %52 = vmatprep.subr.mxu0 0.0
    %53 = vmatpush1.msra.mxu0 %v22
    %54 = vmatprep.subr.mxu0 0.0
    %55 = vmatpush1.msra.mxu0 %v23
    %56 = vmatprep.subr.mxu0 0.0
    %57 = vmatpush1.msra.mxu0 0.0
    %58 = vmatprep.subr.mxu0 0.0
    %59 = vmatpush1.msra.mxu0 0.0
    %60 = vmatprep.subr.mxu0 0.0
    %61 = vmatpush1.msra.mxu0 0.0
    %62 = vmatprep.subr.mxu0 0.0
    %63 = vmatpush1.msra.mxu0 0.0
    %64 = vmatprep.subr.mxu0 0.0
    %65 = vmatpush1.msra.mxu0 0.0
    %66 = vmatprep.subr.mxu0 0.0
    %67 = vmatpush1.msra.mxu0 0.0
    %68 = vmatprep.subr.mxu0 0.0
    %69 = vmatpush1.msra.mxu0 0.0
    %70 = vmatprep.subr.mxu0 0.0
    %71 = vmatpush1.msra.mxu0 0.0
    %72 = vmatprep.subr.mxu0 0.0
    %73 = vmatpush1.msra.mxu0 0.0
    %74 = vmatprep.subr.mxu0 0.0
    %75 = vmatpush1.msra.mxu0 0.0
    %76 = vmatprep.subr.mxu0 0.0
    %77 = vmatpush1.msra.mxu0 0.0
    %78 = vmatprep.subr.mxu0 0.0
    %79 = vmatpush1.msra.mxu0 0.0
    %80 = vmatprep.subr.mxu0 0.0
    %81 = vmatpush1.msra.mxu0 0.0
    %82 = vmatprep.subr.mxu0 0.0
    %83 = vmatpush1.msra.mxu0 0.0
    %84 = vmatprep.subr.mxu0 0.0
    %85 = vmatpush1.msra.mxu0 0.0
    %86 = vmatprep.subr.mxu0 0.0
    %87 = vmatpush1.msra.mxu0 0.0
    %88 = vmatprep.subr.mxu0 0.0
    %89 = vmatpush1.msra.mxu0 0.0
    %90 = vmatprep.subr.mxu0 0.0
    %91 = vmatpush1.msra.mxu0 0.0
    %92 = vmatprep.subr.mxu0 0.0
    %93 = vmatpush1.msra.mxu0 0.0
    %94 = vmatprep.subr.mxu0 0.0
    %95 = vmatpush1.msra.mxu0 0.0
    %96 = vmatprep.subr.mxu0 0.0
    %97 = vmatpush1.msra.mxu0 0.0
    %98 = vmatprep.subr.mxu0 0.0
    %99 = vmatpush1.msra.mxu0 0.0
    %100 = vmatprep.subr.mxu0 0.0
    %101 = vmatpush1.msra.mxu0 0.0
    %102 = vmatprep.subr.mxu0 0.0
    %103 = vmatpush1.msra.mxu0 0.0
    %104 = vmatprep.subr.mxu0 0.0
    %105 = vmatpush1.msra.mxu0 0.0
    %106 = vmatprep.subr.mxu0 0.0
    %107 = vmatpush1.msra.mxu0 0.0
    %108 = vmatprep.subr.mxu0 0.0
    %109 = vmatpush1.msra.mxu0 0.0
    %110 = vmatprep.subr.mxu0 0.0
    %111 = vmatpush1.msra.mxu0 0.0
    %112 = vmatprep.mubr.f32.mxu0 0.0
    %113 = vmatmul.mubr.f32.gmra.mrb[0].mxu0 %v46
    %v114 = vpop.f32.mrb[0].mxu0
    %v115 = vadd.f32 %v43, %v114
    %v116 = vpop.f32.mrb[0].mxu0
    %117 = vdwg.mxu0
    %v118 = vmax.f32 %v115, 0.0
    %vm119 = vcmask 130048
    %v121 = vsel %vm119, %v19, 0
    %123 = vmatprep.subr.mxu0 0.0
    %124 = vmatpush1.msra.mxu0 %v28
    %125 = vmatprep.subr.mxu0 0.0
    %126 = vmatpush1.msra.mxu0 %v29
    %127 = vmatprep.subr.mxu0 0.0
    %128 = vmatpush1.msra.mxu0 0.0
    %129 = vmatprep.subr.mxu0 0.0
    %130 = vmatpush1.msra.mxu0 0.0
    %131 = vmatprep.subr.mxu0 0.0
    %132 = vmatpush1.msra.mxu0 0.0
    %133 = vmatprep.subr.mxu0 0.0
    %134 = vmatpush1.msra.mxu0 0.0
    %135 = vmatprep.subr.mxu0 0.0
    %136 = vmatpush1.msra.mxu0 0.0
    %137 = vmatprep.subr.mxu0 0.0
    %138 = vmatpush1.msra.mxu0 0.0
    %139 = vmatprep.subr.mxu0 0.0
    %140 = vmatpush1.msra.mxu0 0.0
    %141 = vmatprep.subr.mxu0 0.0
    %142 = vmatpush1.msra.mxu0 0.0
    %143 = vmatprep.subr.mxu0 0.0
    %144 = vmatpush1.msra.mxu0 0.0
    %145 = vmatprep.subr.mxu0 0.0
    %146 = vmatpush1.msra.mxu0 0.0
    %147 = vmatprep.subr.mxu0 0.0
    %148 = vmatpush1.msra.mxu0 0.0
    %149 = vmatprep.subr.mxu0 0.0
    %150 = vmatpush1.msra.mxu0 0.0
    %151 = vmatprep.subr.mxu0 0.0
    %152 = vmatpush1.msra.mxu0 0.0
    %153 = vmatprep.subr.mxu0 0.0
    %154 = vmatpush1.msra.mxu0 0.0
    %155 = vmatprep.subr.mxu0 0.0
    %156 = vmatpush1.msra.mxu0 0.0
    %157 = vmatprep.subr.mxu0 0.0
    %158 = vmatpush1.msra.mxu0 0.0
    %159 = vmatprep.subr.mxu0 0.0
    %160 = vmatpush1.msra.mxu0 0.0
    %161 = vmatprep.subr.mxu0 0.0
    %162 = vmatpush1.msra.mxu0 0.0
    %163 = vmatprep.subr.mxu0 0.0
    %164 = vmatpush1.msra.mxu0 0.0
    %165 = vmatprep.subr.mxu0 0.0
    %166 = vmatpush1.msra.mxu0 0.0
    %167 = vmatprep.subr.mxu0 0.0
    %168 = vmatpush1.msra.mxu0 0.0
    %169 = vmatprep.subr.mxu0 0.0
    %170 = vmatpush1.msra.mxu0 0.0
    %171 = vmatprep.subr.mxu0 0.0
    %172 = vmatpush1.msra.mxu0 0.0
    %173 = vmatprep.subr.mxu0 0.0
    %174 = vmatpush1.msra.mxu0 0.0
    %175 = vmatprep.subr.mxu0 0.0
    %176 = vmatpush1.msra.mxu0 0.0
    %177 = vmatprep.subr.mxu0 0.0
    %178 = vmatpush1.msra.mxu0 0.0
    %179 = vmatprep.subr.mxu0 0.0
    %180 = vmatpush1.msra.mxu0 0.0
    %181 = vmatprep.subr.mxu0 0.0
    %182 = vmatpush1.msra.mxu0 0.0
    %183 = vmatprep.subr.mxu0 0.0
    %184 = vmatpush1.msra.mxu0 0.0
    %185 = vmatprep.subr.mxu0 0.0
    %186 = vmatpush1.msra.mxu0 0.0
    %187 = vmatprep.mubr.f32.mxu0 0.0
    %188 = vmatmul.mubr.f32.gmra.mrb[0].mxu0 %v121
    %v189 = vpop.f32.mrb[0].mxu0
    %v190 = vadd.f32 0.0, %v189
    %v191 = vpop.f32.mrb[0].mxu0
    %192 = vdwg.mxu0
    %v194 = vsel %vm44, %v118, 0
    %196 = vmatprep.subr.mxu0 0.0
    %197 = vmatpush1.msra.mxu0 %v24
    %198 = vmatprep.subr.mxu0 0.0
    %199 = vmatpush1.msra.mxu0 %v25
    %200 = vmatprep.subr.mxu0 0.0
    %201 = vmatpush1.msra.mxu0 %v26
    %202 = vmatprep.subr.mxu0 0.0
    %203 = vmatpush1.msra.mxu0 %v27
    %204 = vmatprep.subr.mxu0 0.0
    %205 = vmatpush1.msra.mxu0 0.0
    %206 = vmatprep.subr.mxu0 0.0
    %207 = vmatpush1.msra.mxu0 0.0
    %208 = vmatprep.subr.mxu0 0.0
    %209 = vmatpush1.msra.mxu0 0.0
    %210 = vmatprep.subr.mxu0 0.0
    %211 = vmatpush1.msra.mxu0 0.0
    %212 = vmatprep.subr.mxu0 0.0
    %213 = vmatpush1.msra.mxu0 0.0
    %214 = vmatprep.subr.mxu0 0.0
    %215 = vmatpush1.msra.mxu0 0.0
    %216 = vmatprep.subr.mxu0 0.0
    %217 = vmatpush1.msra.mxu0 0.0
    %218 = vmatprep.subr.mxu0 0.0
    %219 = vmatpush1.msra.mxu0 0.0
    %220 = vmatprep.subr.mxu0 0.0
    %221 = vmatpush1.msra.mxu0 0.0
    %222 = vmatprep.subr.mxu0 0.0
    %223 = vmatpush1.msra.mxu0 0.0
    %224 = vmatprep.subr.mxu0 0.0
    %225 = vmatpush1.msra.mxu0 0.0
    %226 = vmatprep.subr.mxu0 0.0
    %227 = vmatpush1.msra.mxu0 0.0
    %228 = vmatprep.subr.mxu0 0.0
    %229 = vmatpush1.msra.mxu0 0.0
    %230 = vmatprep.subr.mxu0 0.0
    %231 = vmatpush1.msra.mxu0 0.0
    %232 = vmatprep.subr.mxu0 0.0
    %233 = vmatpush1.msra.mxu0 0.0
    %234 = vmatprep.subr.mxu0 0.0
    %235 = vmatpush1.msra.mxu0 0.0
    %236 = vmatprep.subr.mxu0 0.0
    %237 = vmatpush1.msra.mxu0 0.0
    %238 = vmatprep.subr.mxu0 0.0
    %239 = vmatpush1.msra.mxu0 0.0
    %240 = vmatprep.subr.mxu0 0.0
    %241 = vmatpush1.msra.mxu0 0.0
    %242 = vmatprep.subr.mxu0 0.0
    %243 = vmatpush1.msra.mxu0 0.0
    %244 = vmatprep.subr.mxu0 0.0
    %245 = vmatpush1.msra.mxu0 0.0
    %246 = vmatprep.subr.mxu0 0.0
    %247 = vmatpush1.msra.mxu0 0.0
    %248 = vmatprep.subr.mxu0 0.0
    %249 = vmatpush1.msra.mxu0 0.0
    %250 = vmatprep.subr.mxu0 0.0
    %251 = vmatpush1.msra.mxu0 0.0
    %252 = vmatprep.subr.mxu0 0.0
    %253 = vmatpush1.msra.mxu0 0.0
    %254 = vmatprep.subr.mxu0 0.0
    %255 = vmatpush1.msra.mxu0 0.0
    %256 = vmatprep.subr.mxu0 0.0
    %257 = vmatpush1.msra.mxu0 0.0
    %258 = vmatprep.subr.mxu0 0.0
    %259 = vmatpush1.msra.mxu0 0.0
    %260 = vmatprep.mubr.f32.mxu0 0.0
    %261 = vmatmul.mubr.f32.gmra.mrb[0].mxu0 %v194
    %v262 = vpop.f32.mrb[0].mxu0
    %v263 = vadd.f32 %v190, %v262
    %v264 = vpop.f32.mrb[0].mxu0
    %265 = vdwg.mxu0
    %v266 = vlaneseq
    %v267 = vshrl.u32 %v266, 7
    %v268 = vsub.s32 0, %v267
    %v269 = vrot.slane %v37, %v268
    %v270 = vadd.f32 %v263, %v269
    %v271 = vlaneseq
    %v272 = vshrl.u32 %v271, 7
    %v273 = vsub.s32 0, %v272
    %v274 = vrot.slane %v38, %v273
    %v276 = vsel %vm119, %v270, 0
    %278 = vmatprep.subr.mxu0 0.0
    %279 = vmatpush1.msra.mxu0 %v30
    %280 = vmatprep.subr.mxu0 0.0
    %281 = vmatpush1.msra.mxu0 %v31
    %282 = vmatprep.subr.mxu0 0.0
    %283 = vmatpush1.msra.mxu0 0.0
    %284 = vmatprep.subr.mxu0 0.0
    %285 = vmatpush1.msra.mxu0 0.0
    %286 = vmatprep.subr.mxu0 0.0
    %287 = vmatpush1.msra.mxu0 0.0
    %288 = vmatprep.subr.mxu0 0.0
    %289 = vmatpush1.msra.mxu0 0.0
    %290 = vmatprep.subr.mxu0 0.0
    %291 = vmatpush1.msra.mxu0 0.0
    %292 = vmatprep.subr.mxu0 0.0
    %293 = vmatpush1.msra.mxu0 0.0
    %294 = vmatprep.subr.mxu0 0.0
    %295 = vmatpush1.msra.mxu0 0.0
    %296 = vmatprep.subr.mxu0 0.0
    %297 = vmatpush1.msra.mxu0 0.0
    %298 = vmatprep.subr.mxu0 0.0
    %299 = vmatpush1.msra.mxu0 0.0
    %300 = vmatprep.subr.mxu0 0.0
    %301 = vmatpush1.msra.mxu0 0.0
    %302 = vmatprep.subr.mxu0 0.0
    %303 = vmatpush1.msra.mxu0 0.0
    %304 = vmatprep.subr.mxu0 0.0
    %305 = vmatpush1.msra.mxu0 0.0
    %306 = vmatprep.subr.mxu0 0.0
    %307 = vmatpush1.msra.mxu0 0.0
    %308 = vmatprep.subr.mxu0 0.0
    %309 = vmatpush1.msra.mxu0 0.0
    %310 = vmatprep.subr.mxu0 0.0
    %311 = vmatpush1.msra.mxu0 0.0
    %312 = vmatprep.subr.mxu0 0.0
    %313 = vmatpush1.msra.mxu0 0.0
    %314 = vmatprep.subr.mxu0 0.0
    %315 = vmatpush1.msra.mxu0 0.0
    %316 = vmatprep.subr.mxu0 0.0
    %317 = vmatpush1.msra.mxu0 0.0
    %318 = vmatprep.subr.mxu0 0.0
    %319 = vmatpush1.msra.mxu0 0.0
    %320 = vmatprep.subr.mxu0 0.0
    %321 = vmatpush1.msra.mxu0 0.0
    %322 = vmatprep.subr.mxu0 0.0
    %323 = vmatpush1.msra.mxu0 0.0
    %324 = vmatprep.subr.mxu0 0.0
    %325 = vmatpush1.msra.mxu0 0.0
    %326 = vmatprep.subr.mxu0 0.0
    %327 = vmatpush1.msra.mxu0 0.0
    %328 = vmatprep.subr.mxu0 0.0
    %329 = vmatpush1.msra.mxu0 0.0
    %330 = vmatprep.subr.mxu0 0.0
    %331 = vmatpush1.msra.mxu0 0.0
    %332 = vmatprep.subr.mxu0 0.0
    %333 = vmatpush1.msra.mxu0 0.0
    %334 = vmatprep.subr.mxu0 0.0
    %335 = vmatpush1.msra.mxu0 0.0
    %336 = vmatprep.subr.mxu0 0.0
    %337 = vmatpush1.msra.mxu0 0.0
    %338 = vmatprep.subr.mxu0 0.0
    %339 = vmatpush1.msra.mxu0 0.0
    %340 = vmatprep.subr.mxu0 0.0
    %341 = vmatpush1.msra.mxu0 0.0
    %342 = vmatprep.mubr.f32.mxu0 0.0
    %343 = vmatmul.mubr.f32.gmra.mrb[0].mxu0 %v276
    %v344 = vpop.f32.mrb[0].mxu0
    %v345 = vadd.f32 %v274, %v344
    %v346 = vpop.f32.mrb[0].mxu0
    %347 = vdwg.mxu0
    %v348 = vmax.f32 %v345, 0.0
    %v349 = vlaneseq
    %v350 = vshrl.u32 %v349, 7
    %v351 = vsub.s32 0, %v350
    %v352 = vrot.slane %v39, %v351
    %v354 = vsel %vm44, %v348, 0
    %356 = vmatprep.subr.mxu0 0.0
    %357 = vmatpush1.msra.mxu0 %v32
    %358 = vmatprep.subr.mxu0 0.0
    %359 = vmatpush1.msra.mxu0 %v33
    %360 = vmatprep.subr.mxu0 0.0
    %361 = vmatpush1.msra.mxu0 %v34
    %362 = vmatprep.subr.mxu0 0.0
    %363 = vmatpush1.msra.mxu0 %v35
    %364 = vmatprep.subr.mxu0 0.0
    %365 = vmatpush1.msra.mxu0 0.0
    %366 = vmatprep.subr.mxu0 0.0
    %367 = vmatpush1.msra.mxu0 0.0
    %368 = vmatprep.subr.mxu0 0.0
    %369 = vmatpush1.msra.mxu0 0.0
    %370 = vmatprep.subr.mxu0 0.0
    %371 = vmatpush1.msra.mxu0 0.0
    %372 = vmatprep.subr.mxu0 0.0
    %373 = vmatpush1.msra.mxu0 0.0
    %374 = vmatprep.subr.mxu0 0.0
    %375 = vmatpush1.msra.mxu0 0.0
    %376 = vmatprep.subr.mxu0 0.0
    %377 = vmatpush1.msra.mxu0 0.0
    %378 = vmatprep.subr.mxu0 0.0
    %379 = vmatpush1.msra.mxu0 0.0
    %380 = vmatprep.subr.mxu0 0.0
    %381 = vmatpush1.msra.mxu0 0.0
    %382 = vmatprep.subr.mxu0 0.0
    %383 = vmatpush1.msra.mxu0 0.0
    %384 = vmatprep.subr.mxu0 0.0
    %385 = vmatpush1.msra.mxu0 0.0
    %386 = vmatprep.subr.mxu0 0.0
    %387 = vmatpush1.msra.mxu0 0.0
    %388 = vmatprep.subr.mxu0 0.0
    %389 = vmatpush1.msra.mxu0 0.0
    %390 = vmatprep.subr.mxu0 0.0
    %391 = vmatpush1.msra.mxu0 0.0
    %392 = vmatprep.subr.mxu0 0.0
    %393 = vmatpush1.msra.mxu0 0.0
    %394 = vmatprep.subr.mxu0 0.0
    %395 = vmatpush1.msra.mxu0 0.0
    %396 = vmatprep.subr.mxu0 0.0
    %397 = vmatpush1.msra.mxu0 0.0
    %398 = vmatprep.subr.mxu0 0.0
    %399 = vmatpush1.msra.mxu0 0.0
    %400 = vmatprep.subr.mxu0 0.0
    %401 = vmatpush1.msra.mxu0 0.0
    %402 = vmatprep.subr.mxu0 0.0
    %403 = vmatpush1.msra.mxu0 0.0
    %404 = vmatprep.subr.mxu0 0.0
    %405 = vmatpush1.msra.mxu0 0.0
    %406 = vmatprep.subr.mxu0 0.0
    %407 = vmatpush1.msra.mxu0 0.0
    %408 = vmatprep.subr.mxu0 0.0
    %409 = vmatpush1.msra.mxu0 0.0
    %410 = vmatprep.subr.mxu0 0.0
    %411 = vmatpush1.msra.mxu0 0.0
    %412 = vmatprep.subr.mxu0 0.0
    %413 = vmatpush1.msra.mxu0 0.0
    %414 = vmatprep.subr.mxu0 0.0
    %415 = vmatpush1.msra.mxu0 0.0
    %416 = vmatprep.subr.mxu0 0.0
    %417 = vmatpush1.msra.mxu0 0.0
    %418 = vmatprep.subr.mxu0 0.0
    %419 = vmatpush1.msra.mxu0 0.0
    %420 = vmatprep.mubr.f32.mxu0 0.0
    %421 = vmatmul.mubr.f32.gmra.mrb[0].mxu0 %v354
    %v422 = vpop.f32.mrb[0].mxu0
    %v423 = vadd.f32 %v352, %v422
    %v424 = vpop.f32.mrb[0].mxu0
    %425 = vdwg.mxu0
    %426 = vst.msk [vmem:[#allocation2] sm:$0xff] %vm44, %v423
    // Predicated region
    $region18: #{tpu_custom_call.1} parent=1 // pred_check
      _
    $region19: #{tpu_custom_call.1} parent=1 // pred_check_branch
      %428 = sbr.rel (0) target = $region21
    $region20: #{tpu_custom_call.1} parent=1 // pred_region
      %s430 = ssub.s32 128, 128
      %431 = vsyncadd [#allocation3], %s430
      %s433 = sshll.u32 [#allocation2], 4
      %s434 = int_to_ptr.vmem [resolvable:$true] %s433
      %436 = dma.vmem_to_hbm [thread:$0]  %s434, 128, %s4, [#allocation3]
    $region21: #{tpu_custom_call.1} parent=1 // pred_fallthru
      _
    // Predicated region
    $region22: #{tpu_custom_call.1} parent=1 // pred_check
      _
    $region23: #{tpu_custom_call.1} parent=1 // pred_check_branch
      %438 = sbr.rel (0) target = $region25
    $region24: #{tpu_custom_call.1} parent=1 // pred_region
      %439 = dma.done [#allocation3], 128
    $region25: #{tpu_custom_call.1} parent=1 // pred_fallthru
      _
    %440 = vsyncpa [#allocation3], 1

</llo_original>
